<compile_context>
chip_gen: v6e
topology: v6e:2x2x1
jax: 0.10.0
libtpu: 0.0.40
codegen_flags: <defaults>
</compile_context>

<pallas_src>
import numpy as np
import jax
import jax.numpy as jnp
from jax.experimental import pallas as pl
from jax.experimental.pallas import tpu as pltpu


# ----------------------------- Pallas kernels ------------------------------

def _matmul_bias_kernel(x_ref, w_ref, b_ref, o_ref):
    o_ref[...] = (
        jnp.dot(x_ref[...], w_ref[...], preferred_element_type=jnp.float32)
        + b_ref[...]
    )


def matmul_bias(x, w, b):
    """x:(M,K) @ w:(K,N) + b:(1,N) -> (M,N); whole arrays resident in VMEM."""
    M = x.shape[0]
    N = w.shape[1]
    return pl.pallas_call(
        _matmul_bias_kernel,
        out_shape=jax.ShapeDtypeStruct((M, N), jnp.float32),
    )(x.astype(jnp.float32), w.astype(jnp.float32), b.astype(jnp.float32))


def _bias_prep_kernel(cfg_ref, cond_ref, uncond_ref, ctxw_ref, temb_ref,
                      timew_ref, o_ref):
    # One-shot conditioning prep (runs once per generation, not per step):
    # pool the CLIP contexts, project context + time embeddings to latent
    # channels and fold the classifier-free-guidance combine into a single
    # per-(step, batch, channel) bias table.
    cfg = cfg_ref[0]
    cpool = jnp.mean(cond_ref[...], axis=1)                    # (B, D)
    upool = jnp.mean(uncond_ref[...], axis=1)                  # (B, D)
    c_bias = jnp.dot(cpool, ctxw_ref[...], preferred_element_type=jnp.float32)
    u_bias = jnp.dot(upool, ctxw_ref[...], preferred_element_type=jnp.float32)
    t_bias = jnp.dot(temb_ref[...], timew_ref[...],
                     preferred_element_type=jnp.float32)       # (S, C)
    comb = u_bias + cfg * (c_bias - u_bias)                    # (B, C)
    S = t_bias.shape[0]
    B, C = comb.shape
    o_ref[...] = (jnp.broadcast_to(t_bias[:, None, :], (S, B, C))
                  + jnp.broadcast_to(comb[None, :, :], (S, B, C)))


def bias_prep(cfg_scale, cond_ctx, uncond_ctx, ctx_w, temb, time_w):
    S = temb.shape[0]
    B = cond_ctx.shape[0]
    C = ctx_w.shape[1]
    cfg = jnp.array([float(cfg_scale)], jnp.float32)
    smem = pl.BlockSpec(memory_space=pltpu.MemorySpace.SMEM)
    vmem = pl.BlockSpec(memory_space=pltpu.MemorySpace.VMEM)
    return pl.pallas_call(
        _bias_prep_kernel,
        in_specs=[smem, vmem, vmem, vmem, vmem, vmem],
        out_specs=vmem,
        out_shape=jax.ShapeDtypeStruct((S, B, C), jnp.float32),
    )(cfg, cond_ctx.astype(jnp.float32), uncond_ctx.astype(jnp.float32),
      ctx_w.astype(jnp.float32), temb.astype(jnp.float32),
      time_w.astype(jnp.float32))


def _denoise_kernel(scal_ref, bias_ref, wconv_ref, lat0_ref, su_ref, sc_ref,
                    out_ref, lat):
    # Fused denoising loop: grid axis = inference step; latents live in the
    # `lat` VMEM scratch across all steps.  Per-step scalars come from SMEM.
    # 3x3 'same' conv: shifted+zero-padded taps built as SU[dy] @ X @ SC[dx]
    # (tile-aligned 0/1 matmuls), channel contraction as scalar VPU FMAs.
    B, C, H, W = lat0_ref.shape
    step = pl.program_id(0)

    @pl.when(step == 0)
    def _init():
        lat[...] = lat0_ref[...]

    coef_a = scal_ref[step, 0]
    coef_b = scal_ref[step, 1]

    for b in range(B):
        # snapshot current latent planes before overwriting them
        planes = [lat[b, ci] for ci in range(C)]                 # (H, W) each
        taps = []                                                # taps[ci][dy*3+dx]
        for ci in range(C):
            rows = [jnp.dot(su_ref[dy], planes[ci],
                            preferred_element_type=jnp.float32)
                    for dy in range(3)]
            taps.append([jnp.dot(rows[dy], sc_ref[dx],
                                 preferred_element_type=jnp.float32)
                         for dy in range(3) for dx in range(3)])
        new_planes = []
        for co in range(C):
            # eps = conv3x3(latents) + (time + CFG-combined context) bias
            acc = jnp.zeros((H, W), jnp.float32) + bias_ref[step, b * C + co]
            for t in range(9):
                for ci in range(C):
                    acc = acc + taps[ci][t] * wconv_ref[t * C * C + ci * C + co]
            # deterministic DDPM mean update
            new_planes.append(coef_a * (planes[co] - coef_b * acc))
        for co in range(C):
            lat[b, co] = new_planes[co]

    out_ref[...] = lat[...]


def denoise_loop(lat0, scal, bias_flat, wconv_flat, shift_rows, shift_cols):
    S = scal.shape[0]
    B, C, H, W = lat0.shape
    smem = pl.BlockSpec(memory_space=pltpu.MemorySpace.SMEM)
    return pl.pallas_call(
        _denoise_kernel,
        grid=(S,),
        in_specs=[
            smem,                                               # (S, 2) coefs
            smem,                                               # (S, B*C) bias
            smem,                                               # (9*C*C,) conv w
            pl.BlockSpec((B, C, H, W), lambda s: (0, 0, 0, 0)),  # latents init
            pl.BlockSpec((3, H, H), lambda s: (0, 0, 0)),        # row shifts
            pl.BlockSpec((3, W, W), lambda s: (0, 0, 0)),        # col shifts
        ],
        out_specs=pl.BlockSpec((B, C, H, W), lambda s: (0, 0, 0, 0)),
        out_shape=jax.ShapeDtypeStruct((B, C, H, W), jnp.float32),
        scratch_shapes=[pltpu.VMEM((B, C, H, W), jnp.float32)],
        compiler_params=pltpu.CompilerParams(
            dimension_semantics=("arbitrary",)),
    )(scal.astype(jnp.float32), bias_flat.astype(jnp.float32),
      wconv_flat.astype(jnp.float32), lat0.astype(jnp.float32),
      shift_rows.astype(jnp.float32), shift_cols.astype(jnp.float32))


def _decode_kernel(latp_ref, ew_ref, eh_ref, decw_ref, decb_ref, o_ref):
    # Fused VAE-decode of one image: 1x1 conv (4->3) as VPU FMAs, rescale
    # (-1,1)->(0,255) + clamp, then x8 nearest upsample + channel interleave
    # as two 0/1 expansion matmuls so the output slab (H, W*3) is lane-dense.
    C_in = latp_ref.shape[0]
    n_ch = ew_ref.shape[0]
    m = jnp.zeros(ew_ref.shape[1:], jnp.float32)                # (h_lat, W*3)
    for c in range(n_ch):
        plane = jnp.zeros(latp_ref.shape[1:], jnp.float32) + decb_ref[0, c]
        for ci in range(C_in):
            plane = plane + latp_ref[ci] * decw_ref[ci, c]
        img = jnp.clip((plane + 1.0) * 127.5, 0.0, 255.0)       # rescale+clamp
        m = m + jnp.dot(img, ew_ref[c], preferred_element_type=jnp.float32)
    o_ref[...] = jnp.dot(eh_ref[...], m, preferred_element_type=jnp.float32)


def decode_to_image(lat_planes, dec_w, dec_b, ew, eh):
    Hout = eh.shape[0]
    Wout3 = ew.shape[2]
    smem = pl.BlockSpec(memory_space=pltpu.MemorySpace.SMEM)
    vmem = pl.BlockSpec(memory_space=pltpu.MemorySpace.VMEM)
    return pl.pallas_call(
        _decode_kernel,
        in_specs=[vmem, vmem, vmem, smem, smem],
        out_specs=vmem,
        out_shape=jax.ShapeDtypeStruct((Hout, Wout3), jnp.float32),
    )(lat_planes.astype(jnp.float32), ew.astype(jnp.float32),
      eh.astype(jnp.float32), dec_w.astype(jnp.float32),
      dec_b.astype(jnp.float32))


# ------------------------------- Model glue --------------------------------

class LoRAniDiffPallas:
    """Synthetic LoRAniDiff with Pallas hot paths. Text-to-image (images=None)."""

    def __init__(self, key, alpha=0.5, n_inference_steps=4,
                 width=128, height=128, d_embed=32, seq_len=8, vocab=64):
        self.alpha = alpha
        self.width = width
        self.height = height
        self.latents_width = width // 8
        self.latents_height = height // 8
        self.n_inference_steps = n_inference_steps
        self.d_embed = d_embed
        self.seq_len = seq_len
        self.vocab = vocab
        self.lat_c = 4

        ks = jax.random.split(key, 6)
        s = 0.05
        # synthetic "CLIP": token embedding + one linear layer
        self.token_emb = s * jax.random.normal(ks[0], (vocab, d_embed), jnp.float32)
        self.clip_w = s * jax.random.normal(ks[1], (d_embed, d_embed), jnp.float32)
        self.clip_b = jnp.zeros((1, d_embed), jnp.float32)
        # synthetic "diffusion" UNet-lite: 3x3 conv + time/context channel biases
        self.conv_w = s * jax.random.normal(
            ks[2], (3, 3, self.lat_c, self.lat_c), jnp.float32)
        self.conv_w_flat = self.conv_w.reshape(-1)   # (tap, ci, co) scalar table
        self.time_w = s * jax.random.normal(ks[3], (320, self.lat_c), jnp.float32)
        self.ctx_w = s * jax.random.normal(ks[4], (d_embed, self.lat_c), jnp.float32)
        # synthetic "VAE decoder": 1x1 conv (4 -> 3 channels) + nearest x8 upsample
        self.dec_w = s * jax.random.normal(ks[5], (self.lat_c, 3), jnp.float32)
        self.dec_b = jnp.zeros((1, 3), jnp.float32)

        # DDPM scheduler (deterministic, simplified)
        num_train = 1000
        betas = np.linspace(1e-4, 0.02, num_train, dtype=np.float64)
        alphas = 1.0 - betas
        alpha_bars = np.cumprod(alphas)
        step_ratio = num_train // n_inference_steps
        self.timesteps = (np.arange(0, n_inference_steps) * step_ratio)[::-1].copy()
        coef_a = 1.0 / np.sqrt(alphas)
        coef_b = betas / np.sqrt(1.0 - alpha_bars)
        # per-step [coef_a, coef_b] table (hoisted out of the loop)
        self.scal = jnp.asarray(
            np.stack([coef_a[self.timesteps], coef_b[self.timesteps]], axis=1),
            jnp.float32)                                            # (S, 2)

        # time-embedding table for the selected timesteps (S, 320)
        self.temb_table = jnp.asarray(
            np.concatenate([self.get_time_embedding(int(t))
                            for t in self.timesteps], axis=0), jnp.float32)

        # constant 0/1 shift matrices for the in-kernel 3x3 'same' conv
        Hl, Wl = self.latents_height, self.latents_width
        su = np.zeros((3, Hl, Hl), np.float32)
        sc = np.zeros((3, Wl, Wl), np.float32)
        for d in range(3):
            off = d - 1
            for h in range(Hl):
                if 0 <= h + off < Hl:
                    su[d, h, h + off] = 1.0
            for w in range(Wl):
                if 0 <= w + off < Wl:
                    sc[d, w + off, w] = 1.0
        self.shift_rows = jnp.asarray(su)
        self.shift_cols = jnp.asarray(sc)

        # constant 0/1 expansion matrices for the fused decoder
        up = 8
        ew = np.zeros((3, Wl, Wl * up * 3), np.float32)
        for c in range(3):
            for ws in range(Wl):
                for wr in range(up):
                    ew[c, ws, (ws * up + wr) * 3 + c] = 1.0
        eh = np.zeros((Hl * up, Hl), np.float32)
        for ho in range(Hl * up):
            eh[ho, ho // up] = 1.0
        self.ew = jnp.asarray(ew)
        self.eh = jnp.asarray(eh)

    # ---- components -------------------------------------------------------

    @staticmethod
    def get_time_embedding(timestep):
        freqs = np.power(10000.0, -np.arange(0, 160, dtype=np.float32) / 160.0)
        x = np.array([[float(timestep)]], dtype=np.float32) * freqs[None, :]
        return np.concatenate([np.cos(x), np.sin(x)], axis=-1)  # (1, 320)

    def clip_encode(self, tokens):
        Bt, L = tokens.shape
        emb = jnp.take(self.token_emb, tokens, axis=0)           # glue gather
        x = emb.reshape(Bt * L, self.d_embed)
        out = matmul_bias(x, self.clip_w, self.clip_b)           # Pallas matmul
        return out.reshape(Bt, L, self.d_embed)

    # ---- forward -----------------------------------------------------------

    def forward(self, prompt_tokens, uncond_tokens, images=None,
                do_cfg=True, cfg_scale=7.5, strength=0.8, key=None):
        B = prompt_tokens.shape[0]
        latents_shape = (B, self.lat_c, self.latents_height, self.latents_width)

        # single CLIP pass for cond + uncond prompts (one Pallas matmul launch)
        all_ctx = self.clip_encode(
            jnp.concatenate([prompt_tokens, uncond_tokens], axis=0))
        cond_context = all_ctx[:B]
        uncond_context = all_ctx[B:]
        if do_cfg:
            context = jnp.concatenate([cond_context, uncond_context], axis=0)
            guid_uncond = uncond_context
            scale = float(cfg_scale)
        else:
            context = cond_context
            guid_uncond = cond_context
            scale = 1.0

        # TODO(synk): image-to-image path (VAE encoder + sampler.add_noise) not
        # implemented; only the images=None (pure text-to-image) branch.
        latents = jax.random.normal(key, latents_shape, jnp.float32)

        # Per-step effective conditioning bias with CFG folded in (exact only
        # because this synthetic UNet is affine in its conditioning bias).
        bias_tab = bias_prep(scale, cond_context, guid_uncond, self.ctx_w,
                             self.temb_table, self.time_w)        # (S, B, C)
        bias_flat = bias_tab.reshape(self.n_inference_steps, B * self.lat_c)

        # Fused denoising loop: one pallas_call, latents stay in VMEM.
        # TODO(synk): DDPM variance-noise term omitted (deterministic mean step).
        latents = denoise_loop(latents, self.scal, bias_flat, self.conv_w_flat,
                               self.shift_rows, self.shift_cols)

        # Fused decode of the returned image only (batch 0), lane-dense slab.
        img_slab = decode_to_image(latents[0], self.dec_w, self.dec_b,
                                   self.ew, self.eh)              # (H, W*3)
        # TODO(synk): final uint8 cast kept as trivial XLA glue (truncating
        # cast, matching torch .to(uint8)); not fused into the Pallas kernel.
        image = img_slab.reshape(self.height, self.width, 3).astype(jnp.uint8)
        return image, context, uncond_context


# --------------------------------- main -------------------------------------

if __name__ == "__main__":
    root = jax.random.PRNGKey(0)
    k_params, k_tok, k_lat = jax.random.split(root, 3)

    model = LoRAniDiffPallas(k_params, n_inference_steps=4,
                             width=128, height=128, d_embed=32, seq_len=8,
                             vocab=64)

    B, L = 2, 8
    # synthetic "tokenizer" output: deterministic random token ids / pad ids
    prompt_tokens = jax.random.randint(k_tok, (B, L), 0, model.vocab,
                                       dtype=jnp.int32)
    uncond_tokens = jnp.zeros((B, L), jnp.int32)

    img, ctx, uctx = model.forward(prompt_tokens, uncond_tokens,
                                   do_cfg=True, cfg_scale=7.5, key=k_lat)
    jax.block_until_ready((img, ctx, uctx))

    assert img.shape == (128, 128, 3) and img.dtype == jnp.uint8
    assert ctx.shape == (2 * B, L, 32) and uctx.shape == (B, L, 32)
    print("KERNEL_OK")
</pallas_src>

<mosaic_0001>
module attributes {stable_mosaic.version = 11 : i64} {
  func.func @_matmul_bias_kernel(%arg0: memref<32x32xf32, #tpu.memory_space<vmem>>, %arg1: memref<32x32xf32, #tpu.memory_space<vmem>>, %arg2: memref<1x32xf32, #tpu.memory_space<vmem>>, %arg3: memref<32x32xf32, #tpu.memory_space<vmem>>) attributes {dimension_semantics = [], scalar_prefetch = 0 : i64, scratch_operands = 0 : i64, tpu.core_type = #tpu.core_type<tc>} {
    %c0 = arith.constant 0 : index
    %c0_0 = arith.constant 0 : index
    %0 = vector.load %arg0[%c0, %c0_0] : memref<32x32xf32, #tpu.memory_space<vmem>>, vector<32x32xf32>
    %c0_1 = arith.constant 0 : index
    %c0_2 = arith.constant 0 : index
    %1 = vector.load %arg1[%c0_1, %c0_2] : memref<32x32xf32, #tpu.memory_space<vmem>>, vector<32x32xf32>
    %cst = arith.constant dense<0.000000e+00> : vector<32x32xf32>
    %2 = tpu.matmul %0, %1, %cst {dimension_numbers = #tpu.dot_dimension_numbers<[1], [0], [0], [1], [0, 0, 1, 1], [], []>} : vector<32x32xf32>, vector<32x32xf32>, vector<32x32xf32> -> vector<32x32xf32>
    %c0_3 = arith.constant 0 : index
    %c0_4 = arith.constant 0 : index
    %3 = vector.load %arg2[%c0_3, %c0_4] : memref<1x32xf32, #tpu.memory_space<vmem>>, vector<1x32xf32>
    %4 = vector.broadcast %3 : vector<1x32xf32> to vector<32x32xf32>
    %5 = arith.addf %2, %4 : vector<32x32xf32>
    %c0_5 = arith.constant 0 : index
    %c0_6 = arith.constant 0 : index
    %6 = vector.load %arg3[%c0_5, %c0_6] : memref<32x32xf32, #tpu.memory_space<vmem>>, vector<32x32xf32>
    tpu.vector_store %arg3[%c0_5, %c0_6], %5 {strides = array<i32>} : memref<32x32xf32, #tpu.memory_space<vmem>>, vector<32x32xf32>,
    return
  }
}

</mosaic_0001>

<llo_original>
// kernel: tpu_custom_call.1
$region0: #{tpu_custom_call.1}
  #allocation0 [shape = 'u32[]', space=smem, size = 0x4, offset = 0x4, fixed_abs, tag = 'smem constant byte address 0x4 - core index']
  #allocation1 [shape = 'u32[144,128]{1,0:T(1,128)}', space=vmem, size = 0x12000, scoped, tag = 'internal scratch']
  %s0 = inlined_call_operand.hbm [shape: f32[32,32], index: 0, kind: input, shape index: {}]
  %s1 = inlined_call_operand.hbm [shape: f32[32,32], index: 1, kind: input, shape index: {}]
  %s2 = inlined_call_operand.vmem [shape: f32[1,32], index: 2, kind: input, shape index: {}]
  %s3 = inlined_call_operand.hbm [shape: f32[32,32], index: 3, kind: output, shape index: {}]
  %s4 = sld [smem:[#allocation0]]
  $region30: #{tpu_custom_call.1} parent=0
    _
  %s6 = ssub.s32 1, %s4
  %s7 = scalar_select 0, %s6, %s4
  $region1: #{tpu_custom_call.1} parent=0
    #allocation2 [shape = 'u8[16384]{0}', space=vmem, size = 0x4000, scoped, tag = 'input window, operand 0, single buffered']
    #allocation3 [shape = 's32[1]{0}', space=sflag, size = 0x4, scoped, tag = 'scoped memory for tpu_custom_call.1']
    #allocation4 [shape = 's32[1]{0}', space=sflag, size = 0x4, scoped, tag = 'scoped memory for tpu_custom_call.1']
    #allocation5 [shape = 'u8[16384]{0}', space=vmem, size = 0x4000, scoped, tag = 'input window, operand 1, single buffered']
    #allocation6 [shape = 's32[1]{0}', space=sflag, size = 0x4, scoped, tag = 'scoped memory for tpu_custom_call.1']
    #allocation7 [shape = 'u8[16384]{0}', space=vmem, size = 0x4000, scoped, tag = 'output window, operand 0, single buffered']
    %8 = vsyncpa [#allocation3], 0
    %9 = vsyncpa [#allocation6], 0
    %10 = vsyncpa [#allocation4], 0
    // Predicated region
    $region2: #{tpu_custom_call.1} parent=1 // pred_check
      _
    $region3: #{tpu_custom_call.1} parent=1 // pred_check_branch
      %12 = sbr.rel (0) target = $region5
    $region4: #{tpu_custom_call.1} parent=1 // pred_region
      %s14 = ssub.s32 512, 512
      %15 = vsyncadd [#allocation3], %s14
      %s16 = sshll.u32 [#allocation2], 4
      %s17 = int_to_ptr.vmem [resolvable:$true] %s16
      %22 = dma.hbm_to_vmem [thread:$0]  %s0, 512, %s17, [#allocation3], 128, 128, 8
    $region5: #{tpu_custom_call.1} parent=1 // pred_fallthru
      _
    // Predicated region
    $region6: #{tpu_custom_call.1} parent=1 // pred_check
      _
    $region7: #{tpu_custom_call.1} parent=1 // pred_check_branch
      %24 = sbr.rel (0) target = $region9
    $region8: #{tpu_custom_call.1} parent=1 // pred_region
      %s26 = ssub.s32 512, 512
      %27 = vsyncadd [#allocation6], %s26
      %s28 = sshll.u32 [#allocation5], 4
      %s29 = int_to_ptr.vmem [resolvable:$true] %s28
      %34 = dma.hbm_to_vmem [thread:$0]  %s1, 512, %s29, [#allocation6], 128, 128, 8
    $region9: #{tpu_custom_call.1} parent=1 // pred_fallthru
      _
    // Predicated region
    $region10: #{tpu_custom_call.1} parent=1 // pred_check
      _
    $region11: #{tpu_custom_call.1} parent=1 // pred_check_branch
      %36 = sbr.rel (0) target = $region13
    $region12: #{tpu_custom_call.1} parent=1 // pred_region
      _
    $region13: #{tpu_custom_call.1} parent=1 // pred_fallthru
      _
    // Predicated region
    $region14: #{tpu_custom_call.1} parent=1 // pred_check
      _
    $region15: #{tpu_custom_call.1} parent=1 // pred_check_branch
      %38 = sbr.rel (0) target = $region17
    $region16: #{tpu_custom_call.1} parent=1 // pred_region
      %39 = dma.done [#allocation3], 512
    $region17: #{tpu_custom_call.1} parent=1 // pred_fallthru
      _
    // Predicated region
    $region18: #{tpu_custom_call.1} parent=1 // pred_check
      _
    $region19: #{tpu_custom_call.1} parent=1 // pred_check_branch
      %41 = sbr.rel (0) target = $region21
    $region20: #{tpu_custom_call.1} parent=1 // pred_region
      %42 = dma.done [#allocation6], 512
    $region21: #{tpu_custom_call.1} parent=1 // pred_fallthru
      _
    %v43 = vld [vmem:[#allocation2] sm:$0xff]
    %v44 = vld [vmem:[#allocation2 + $0x8] sm:$0xff]
    %v45 = vld [vmem:[#allocation2 + $0x10] sm:$0xff]
    %v46 = vld [vmem:[#allocation2 + $0x18] sm:$0xff]
    %v47 = vld [vmem:[#allocation5] sm:$0xff]
    %v48 = vld [vmem:[#allocation5 + $0x8] sm:$0xff]
    %v49 = vld [vmem:[#allocation5 + $0x10] sm:$0xff]
    %v50 = vld [vmem:[#allocation5 + $0x18] sm:$0xff]
    %v51 = vld [vmem:[%s2] sm:$0x1]
    %v53 = vlaneseq
    %v54 = vshrl.u32 %v53, 7
    %v55 = vsub.s32 0, %v54
    %v56 = vrot.slane %v51, %v55
    %vm58 = vcmask 261120
    %v60 = vsel %vm58, %v43, 0
    %v63 = vsel %vm58, %v44, 0
    %v66 = vsel %vm58, %v45, 0
    %v69 = vsel %vm58, %v46, 0
    %71 = vmatprep.subr.mxu0 0.0
    %72 = vmatpush1.msra.mxu0 0.0
    %73 = vmatprep.subr.mxu0 0.0
    %74 = vmatpush1.msra.mxu0 0.0
    %75 = vmatprep.subr.mxu0 0.0
    %76 = vmatpush1.msra.mxu0 0.0
    %77 = vmatprep.subr.mxu0 0.0
    %78 = vmatpush1.msra.mxu0 0.0
    %79 = vmatprep.subr.mxu0 0.0
    %80 = vmatpush1.msra.mxu0 0.0
    %81 = vmatprep.subr.mxu0 0.0
    %82 = vmatpush1.msra.mxu0 0.0
    %83 = vmatprep.subr.mxu0 0.0
    %84 = vmatpush1.msra.mxu0 0.0
    %85 = vmatprep.subr.mxu0 0.0
    %86 = vmatpush1.msra.mxu0 0.0
    %87 = vmatprep.subr.mxu0 0.0
    %88 = vmatpush1.msra.mxu0 0.0
    %89 = vmatprep.subr.mxu0 0.0
    %90 = vmatpush1.msra.mxu0 0.0
    %91 = vmatprep.subr.mxu0 0.0
    %92 = vmatpush1.msra.mxu0 0.0
    %93 = vmatprep.subr.mxu0 0.0
    %94 = vmatpush1.msra.mxu0 0.0
    %95 = vmatprep.subr.mxu0 0.0
    %96 = vmatpush1.msra.mxu0 %v50
    %97 = vmatprep.subr.mxu0 0.0
    %98 = vmatpush1.msra.mxu0 %v49
    %99 = vmatprep.subr.mxu0 0.0
    %100 = vmatpush1.msra.mxu0 %v48
    %101 = vmatprep.subr.mxu0 0.0
    %102 = vmatpush1.msra.mxu0 %v47
    %103 = vmatprep.subr.mxu0 0.0
    %104 = vmatpush2.msra.mxu0 0.0
    %105 = vmatprep.subr.mxu0 0.0
    %106 = vmatpush2.msra.mxu0 0.0
    %107 = vmatprep.subr.mxu0 0.0
    %108 = vmatpush2.msra.mxu0 0.0
    %109 = vmatprep.subr.mxu0 0.0
    %110 = vmatpush2.msra.mxu0 0.0
    %111 = vmatprep.subr.mxu0 0.0
    %112 = vmatpush2.msra.mxu0 0.0
    %113 = vmatprep.subr.mxu0 0.0
    %114 = vmatpush2.msra.mxu0 0.0
    %115 = vmatprep.subr.mxu0 0.0
    %116 = vmatpush2.msra.mxu0 0.0
    %117 = vmatprep.subr.mxu0 0.0
    %118 = vmatpush2.msra.mxu0 0.0
    %119 = vmatprep.subr.mxu0 0.0
    %120 = vmatpush2.msra.mxu0 0.0
    %121 = vmatprep.subr.mxu0 0.0
    %122 = vmatpush2.msra.mxu0 0.0
    %123 = vmatprep.subr.mxu0 0.0
    %124 = vmatpush2.msra.mxu0 0.0
    %125 = vmatprep.subr.mxu0 0.0
    %126 = vmatpush2.msra.mxu0 0.0
    %127 = vmatprep.subr.mxu0 0.0
    %128 = vmatpush2.msra.mxu0 0.0
    %129 = vmatprep.subr.mxu0 0.0
    %130 = vmatpush2.msra.mxu0 0.0
    %131 = vmatprep.subr.mxu0 0.0
    %132 = vmatpush2.msra.mxu0 0.0
    %133 = vmatprep.subr.mxu0 0.0
    %134 = vmatpush2.msra.mxu0 0.0
    %135 = vmatprep.mubr.f32.mxu0 0.0
    %136 = vmatmul.mubr.f32.gmra.mxu0 %v60
    %v137 = vpop.f32.mrf.mxu0
    %v138 = vadd.f32 %v56, %v137
    %v139 = vpop.f32.mrf.mxu0
    %140 = vmatprep.mubr.f32.mxu0 0.0
    %141 = vmatmul.mubr.f32.gmra.mxu0 %v63
    %v142 = vpop.f32.mrf.mxu0
    %v143 = vadd.f32 %v56, %v142
    %v144 = vpop.f32.mrf.mxu0
    %145 = vmatprep.mubr.f32.mxu0 0.0
    %146 = vmatmul.mubr.f32.gmra.mxu0 %v66
    %v147 = vpop.f32.mrf.mxu0
    %v148 = vadd.f32 %v56, %v147
    %v149 = vpop.f32.mrf.mxu0
    %150 = vmatprep.mubr.f32.mxu0 0.0
    %151 = vmatmul.mubr.f32.gmra.mxu0 %v69
    %v152 = vpop.f32.mrf.mxu0
    %v153 = vadd.f32 %v56, %v152
    %v154 = vpop.f32.mrf.mxu0
    %155 = vdwg.mxu0
    %156 = vst.msk [vmem:[#allocation7] sm:$0xff] %vm58, %v138
    %157 = vst.msk [vmem:[#allocation7 + $0x8] sm:$0xff] %vm58, %v143
    %158 = vst.msk [vmem:[#allocation7 + $0x10] sm:$0xff] %vm58, %v148
    %159 = vst.msk [vmem:[#allocation7 + $0x18] sm:$0xff] %vm58, %v153
    // Predicated region
    $region22: #{tpu_custom_call.1} parent=1 // pred_check
      _
    $region23: #{tpu_custom_call.1} parent=1 // pred_check_branch
      %161 = sbr.rel (0) target = $region25
    $region24: #{tpu_custom_call.1} parent=1 // pred_region
      %s163 = ssub.s32 512, 512
      %164 = vsyncadd [#allocation4], %s163
      %s165 = sshll.u32 [#allocation7], 4
      %s166 = int_to_ptr.vmem [resolvable:$true] %s165
      %171 = dma.vmem_to_hbm [thread:$0]  %s166, 512, %s3, [#allocation4], 128, 128, 8
    $region25: #{tpu_custom_call.1} parent=1 // pred_fallthru
      _
    // Predicated region
    $region26: #{tpu_custom_call.1} parent=1 // pred_check
      _
    $region27: #{tpu_custom_call.1} parent=1 // pred_check_branch
      %173 = sbr.rel (0) target = $region29
    $region28: #{tpu_custom_call.1} parent=1 // pred_region
      %174 = dma.done [#allocation4], 512
    $region29: #{tpu_custom_call.1} parent=1 // pred_fallthru
      _
    %175 = vsyncpa [#allocation3], 1
    %176 = vsyncpa [#allocation6], 1
    %177 = vsyncpa [#allocation4], 1

</llo_original>
